<compile_context>
chip_gen: v7x
topology: tpu7x:2x2x1
jax: 0.10.0
libtpu: 0.0.40
codegen_flags: <defaults>
</compile_context>

<pallas_src>
import functools
from typing import NamedTuple

import jax
import jax.numpy as jnp
from jax.experimental import pallas as pl
from jax.experimental.pallas import tpu as pltpu


def _round_up(n: int, m: int) -> int:
    return ((n + m - 1) // m) * m


class PreparedParams(NamedTuple):
    w1: jax.Array      # (F_pad, H_pad) bf16
    p_slab: jax.Array  # (3, H_pad)     f32  rows: b1 | gamma | beta
    w2: jax.Array      # (H_pad, N_pad) bf16
    b2: jax.Array      # (1, N_pad)     f32


def prediction_mlp_kernel(x_ref, w1_ref, p_ref, w2_ref, b2_ref, o_ref, h_ref):
    """Grid = (n_outer, n_inner); each step writes one lane-dense output tile.

    x_ref  : (B, F_pad)        bf16, resident (Buffered(1), constant index map)
    w1_ref : (F_pad, H_pad)    bf16, resident
    p_ref  : (3, H_pad)        f32 slab: b1 | gamma | beta
    w2_ref : (H_pad, TN)       bf16, tiled along the output axis
    b2_ref : (n_tiles, TN)     f32, resident; row = output tile index
    o_ref  : (B, TN)           output tile
    h_ref  : (B, H_pad)        bf16 VMEM scratch: relu(BN(x @ w1 + b1))
    """
    j = pl.program_id(1)

    # ---- layer 1 + BatchNorm + ReLU: once per outer step (per core) -------
    @pl.when(j == 0)
    def _():
        # Linear: bf16 operands, f32 accumulation on the MXU.
        h_pre = jnp.dot(x_ref[...], w1_ref[...],
                        preferred_element_type=jnp.float32)
        h_pre = h_pre + p_ref[0:1, :]                       # + b1   (f32)

        # BatchNorm1d, training mode: batch mean + biased variance, eps=1e-5.
        # Two-pass variance (no E[x^2]-E[x]^2 cancellation).
        mean = jnp.mean(h_pre, axis=0, keepdims=True)        # (1, H_pad)
        centered = h_pre - mean
        var = jnp.mean(centered * centered, axis=0, keepdims=True)
        inv_std = jax.lax.rsqrt(var + 1e-5)                  # EUP rsqrt

        # h = gamma * (h_pre - mean) * inv_std + beta, then ReLU (all f32).
        a = p_ref[1:2, :] * inv_std
        h = jnp.maximum(a * centered + p_ref[2:3, :], 0.0)

        # Store once as bf16 for the second (MXU) matmul.
        h_ref[...] = h.astype(h_ref.dtype)

    # ---- layer 2: one lane-dense output tile per grid step ----------------
    tile = pl.program_id(0) * pl.num_programs(1) + j         # global tile idx
    out_tile = jnp.dot(h_ref[...], w2_ref[...],
                       preferred_element_type=jnp.float32)
    out_tile = out_tile + b2_ref[pl.ds(tile, 1), :]           # resident b2 row
    o_ref[...] = out_tile.astype(o_ref.dtype)


def prepare_params(params):
    """One-time parameter prep (call outside the per-step path).

    Zero-pads every feature axis to a multiple of 128 (lane-dense, exact) and
    pre-casts the matmul operands to bf16, so the forward wrapper only touches
    the activations.
    """
    w1, b1, gamma, beta, w2, b2 = params
    F, H = w1.shape
    H2, N = w2.shape
    assert H2 == H
    F_pad, H_pad, N_pad = _round_up(F, 128), _round_up(H, 128), _round_up(N, 128)

    w1_p = jnp.pad(w1, ((0, F_pad - F), (0, H_pad - H))).astype(jnp.bfloat16)
    w2_p = jnp.pad(w2, ((0, H_pad - H), (0, N_pad - N))).astype(jnp.bfloat16)
    b2_p = jnp.pad(b2.reshape(1, -1).astype(jnp.float32),
                   ((0, 0), (0, N_pad - N)))

    pad_h = lambda v: jnp.pad(v.reshape(1, -1).astype(jnp.float32),
                              ((0, 0), (0, H_pad - H)))
    p_slab = jnp.concatenate([pad_h(b1), pad_h(gamma), pad_h(beta)], axis=0)

    return PreparedParams(w1=w1_p, p_slab=p_slab, w2=w2_p, b2=b2_p)


def prediction_mlp_forward(x, prepared: PreparedParams, *, out_dim,
                           tn: int = 512, w2_buffers: int = 2,
                           num_core_splits: int = 1,
                           out_dtype=jnp.float32):
    """x: (B, in_dim) float32. Returns (B, out_dim) in out_dtype.

    Tuning notes:
      * tn: output tile width; 512 for v6e/v7x (fills the 2x256 MXU), >=256
        also helps v5e. Clamped to a multiple of 128 dividing N_pad.
      * w2_buffers: 2 default; 3-4 on v6e hides the marginally exposed w2 DMA.
      * num_core_splits: 2 on v7x (megacore) — each core recomputes layer 1
        into its own scratch and handles half of the output tiles.
      * out_dtype: jnp.bfloat16 halves the output HBM writeback (worth it on
        v5e if downstream accepts bf16).
    """
    w1_p, p_slab, w2_p, b2_p = prepared
    B, F = x.shape
    F_pad, H_pad = w1_p.shape
    N_pad = w2_p.shape[1]
    assert F <= F_pad and out_dim <= N_pad

    # Largest multiple of 128 that divides N_pad and is <= tn.
    TN = 128
    t = (min(tn, N_pad) // 128) * 128
    while t >= 128:
        if N_pad % t == 0:
            TN = t
            break
        t -= 128
    n_tiles = N_pad // TN

    # (core, tile) grid split; degrade gracefully if n_tiles isn't divisible.
    n_outer = max(1, min(num_core_splits, n_tiles))
    while n_tiles % n_outer:
        n_outer -= 1
    n_inner = n_tiles // n_outer

    w2_buf = max(1, min(w2_buffers, n_tiles))

    # ---- per-call activation pad + bf16 cast (params already prepared) ----
    x_p = x if F_pad == F else jnp.pad(x, ((0, 0), (0, F_pad - F)))
    x_p = x_p.astype(jnp.bfloat16)
    b2_r = b2_p.reshape(n_tiles, TN)   # tiny; row per output tile

    # ---- explicit VMEM budget (re-derive per generation; cap for v7x) -----
    out_bytes = jnp.dtype(out_dtype).itemsize
    vmem_bytes = (
        B * F_pad * 2                   # x, single-buffered resident
        + F_pad * H_pad * 2             # w1, single-buffered resident
        + 3 * H_pad * 4                 # b1|gamma|beta slab
        + w2_buf * H_pad * TN * 2       # w2 tiles
        + n_tiles * TN * 4              # b2 resident
        + 2 * B * TN * out_bytes        # double-buffered output tiles
        + B * H_pad * 2                 # h scratch (bf16)
        + 3 * B * H_pad * 4             # f32 layer-1/BN intermediates headroom
    )
    vmem_limit = int(min(64 * 1024 * 1024,
                         max(32 * 1024 * 1024, (vmem_bytes * 3) // 2)))

    # ---- cost hint for XLA -------------------------------------------------
    flops = (n_outer * (2 * B * F_pad * H_pad + 8 * B * H_pad)
             + 2 * B * H_pad * N_pad)
    bytes_accessed = (B * F_pad * 2 + F_pad * H_pad * 2 + 3 * H_pad * 4
                      + H_pad * N_pad * 2 + N_pad * 4 + B * N_pad * out_bytes)
    cost = pl.CostEstimate(flops=int(flops),
                           transcendentals=int(n_outer * H_pad),
                           bytes_accessed=int(bytes_accessed))

    out_padded = pl.pallas_call(
        prediction_mlp_kernel,
        out_shape=jax.ShapeDtypeStruct((B, N_pad), out_dtype),
        grid_spec=pltpu.PrefetchScalarGridSpec(
            num_scalar_prefetch=0,
            grid=(n_outer, n_inner),
            in_specs=[
                # Residents: constant block index, single buffer (no pointless
                # double-buffering -> VMEM headroom for large TN / v7x).
                pl.BlockSpec((B, F_pad), lambda c, j: (0, 0),
                             pipeline_mode=pl.Buffered(1)),          # x
                pl.BlockSpec((F_pad, H_pad), lambda c, j: (0, 0),
                             pipeline_mode=pl.Buffered(1)),          # w1
                pl.BlockSpec((3, H_pad), lambda c, j: (0, 0),
                             pipeline_mode=pl.Buffered(1)),          # b1|g|b
                # w2: tiled along the output axis, tunable pipeline depth.
                pl.BlockSpec((H_pad, TN), lambda c, j: (0, c * n_inner + j),
                             pipeline_mode=pl.Buffered(w2_buf)),     # w2 tile
                # b2: resident slab, indexed per-tile inside the kernel.
                pl.BlockSpec((n_tiles, TN), lambda c, j: (0, 0),
                             pipeline_mode=pl.Buffered(1)),          # b2
            ],
            out_specs=pl.BlockSpec((B, TN),
                                   lambda c, j: (0, c * n_inner + j)),
            scratch_shapes=[pltpu.VMEM((B, H_pad), jnp.bfloat16)],
        ),
        compiler_params=pltpu.CompilerParams(
            # Outer axis: independent (each step recomputes layer 1 into its
            # own scratch) -> safe to shard across v7x TensorCores.
            # Inner axis: sequential reuse of the per-core h scratch.
            dimension_semantics=("parallel", "arbitrary"),
            vmem_limit_bytes=vmem_limit),
        cost_estimate=cost,
    )(x_p, w1_p, p_slab, w2_p, b2_r)

    return out_padded[:, :out_dim]


def init_params(key, in_dim, hidden_dim, out_dim):
    """Deterministic PyTorch-like init. Linear weights stored pre-transposed
    as (in, out)."""
    k1, k2, k3, k4 = jax.random.split(key, 4)
    bound1 = 1.0 / (in_dim ** 0.5)
    bound2 = 1.0 / (hidden_dim ** 0.5)
    w1 = jax.random.uniform(k1, (in_dim, hidden_dim), jnp.float32, -bound1, bound1)
    b1 = jax.random.uniform(k2, (hidden_dim,), jnp.float32, -bound1, bound1)
    gamma = jnp.ones((hidden_dim,), jnp.float32)   # BatchNorm1d weight
    beta = jnp.zeros((hidden_dim,), jnp.float32)   # BatchNorm1d bias
    w2 = jax.random.uniform(k3, (hidden_dim, out_dim), jnp.float32, -bound2, bound2)
    b2 = jax.random.uniform(k4, (out_dim,), jnp.float32, -bound2, bound2)
    return (w1, b1, gamma, beta, w2, b2)


if __name__ == "__main__":
    # Small shapes analogous to the SimSiam predictor bottleneck (2048/512/2048).
    # Non-multiples of 128 exercise the lane-dense padding; out_dim=500 ->
    # N_pad=512 -> 4 output tiles at tn=128 (multi-step grid, and divisible by
    # the 2-way core split exercised below).
    B, in_dim, hidden_dim, out_dim = 32, 192, 96, 500

    key = jax.random.PRNGKey(0)
    kx, kp = jax.random.split(key)
    x = jax.random.normal(kx, (B, in_dim), jnp.float32)
    params = init_params(kp, in_dim, hidden_dim, out_dim)

    # Pure-JAX f32 reference (PyTorch training-mode BatchNorm semantics).
    w1, b1, gamma, beta, w2, b2 = params
    h_pre = x @ w1 + b1
    mean = jnp.mean(h_pre, axis=0, keepdims=True)
    var = jnp.mean((h_pre - mean) ** 2, axis=0, keepdims=True)   # biased
    h = gamma * (h_pre - mean) / jnp.sqrt(var + 1e-5) + beta
    h = jnp.maximum(h, 0.0)
    out_ref = h @ w2 + b2

    # One-time parameter pad/cast (hoisted out of the per-call path).
    prepared = prepare_params(params)

    # Config 1: 1-D effective grid (v5e / v6e default structure).
    fwd = jax.jit(functools.partial(prediction_mlp_forward,
                                    out_dim=out_dim, tn=128))
    out1 = fwd(x, prepared)
    jax.block_until_ready(out1)
    assert out1.shape == (B, out_dim)
    # bf16 MXU operands (f32 accumulation) -> tolerance loosened vs pure f32.
    assert jnp.allclose(out1, out_ref, atol=3e-2, rtol=3e-2), (
        "config1 max abs err = %g" % float(jnp.max(jnp.abs(out1 - out_ref))))

    # Config 2: v7x-style 2-way (core, tile) grid + deeper w2 pipelining (v6e).
    fwd2 = jax.jit(functools.partial(prediction_mlp_forward, out_dim=out_dim,
                                     tn=128, num_core_splits=2, w2_buffers=3))
    out2 = fwd2(x, prepared)
    jax.block_until_ready(out2)
    assert out2.shape == (B, out_dim)
    assert jnp.allclose(out2, out_ref, atol=3e-2, rtol=3e-2), (
        "config2 max abs err = %g" % float(jnp.max(jnp.abs(out2 - out_ref))))

    print("KERNEL_OK")
</pallas_src>

<mosaic_0001>
module attributes {stable_mosaic.version = 11 : i64} {
  func.func @prediction_mlp_kernel(%arg0: i32, %arg1: i32, %arg2: memref<32x256xbf16, #tpu.memory_space<vmem>>, %arg3: memref<256x128xbf16, #tpu.memory_space<vmem>>, %arg4: memref<3x128xf32, #tpu.memory_space<vmem>>, %arg5: memref<128x128xbf16, #tpu.memory_space<vmem>>, %arg6: memref<4x128xf32, #tpu.memory_space<vmem>>, %arg7: memref<32x128xf32, #tpu.memory_space<vmem>>, %arg8: memref<32x128xbf16, #tpu.memory_space<vmem>>) attributes {dimension_semantics = [#tpu.dimension_semantics<parallel>, #tpu.dimension_semantics<arbitrary>], iteration_bounds = array<i64: 1, 4>, scalar_prefetch = 0 : i64, scratch_operands = 1 : i64, tpu.core_type = #tpu.core_type<tc>, window_params = [{pipeline_mode = #tpu.pipeline_mode<synchronous>, transform_indices = @transform_0, window_bounds = array<i64: 32, 256>}, {pipeline_mode = #tpu.pipeline_mode<synchronous>, transform_indices = @transform_1, window_bounds = array<i64: 256, 128>}, {pipeline_mode = #tpu.pipeline_mode<synchronous>, transform_indices = @transform_2, window_bounds = array<i64: 3, 128>}, {pipeline_mode = #tpu.pipeline_mode<double_buffered>, transform_indices = @transform_3, window_bounds = array<i64: 128, 128>}, {pipeline_mode = #tpu.pipeline_mode<synchronous>, transform_indices = @transform_4, window_bounds = array<i64: 4, 128>}, {transform_indices = @transform_5, window_bounds = array<i64: 32, 128>}]} {
    %c0_i32 = arith.constant 0 : i32
    %0 = arith.cmpi eq, %arg1, %c0_i32 : i32
    %1 = arith.extui %0 : i1 to i32
    %c0_i32_0 = arith.constant 0 : i32
    %2 = arith.cmpi ne, %1, %c0_i32_0 : i32
    scf.if %2 {
      %c0_7 = arith.constant 0 : index
      %c0_8 = arith.constant 0 : index
      %13 = vector.load %arg2[%c0_7, %c0_8] : memref<32x256xbf16, #tpu.memory_space<vmem>>, vector<32x256xbf16>
      %c0_9 = arith.constant 0 : index
      %c0_10 = arith.constant 0 : index
      %14 = vector.load %arg3[%c0_9, %c0_10] : memref<256x128xbf16, #tpu.memory_space<vmem>>, vector<256x128xbf16>
      %cst_11 = arith.constant dense<0.000000e+00> : vector<32x128xf32>
      %15 = tpu.matmul %13, %14, %cst_11 {dimension_numbers = #tpu.dot_dimension_numbers<[1], [0], [0], [1], [0, 0, 1, 1], [], []>} : vector<32x256xbf16>, vector<256x128xbf16>, vector<32x128xf32> -> vector<32x128xf32>
      %c0_12 = arith.constant 0 : index
      %c0_13 = arith.constant 0 : index
      %16 = vector.load %arg4[%c0_12, %c0_13] : memref<3x128xf32, #tpu.memory_space<vmem>>, vector<1x128xf32>
      %17 = vector.broadcast %16 : vector<1x128xf32> to vector<32x128xf32>
      %18 = arith.addf %15, %17 : vector<32x128xf32>
      %cst_14 = arith.constant dense<0.000000e+00> : vector<128xf32>
      %19 = vector.multi_reduction <add>, %18, %cst_14 [0] : vector<32x128xf32> to vector<128xf32>
      %20 = vector.shape_cast %19 : vector<128xf32> to vector<1x128xf32>
      %cst_15 = arith.constant 3.200000e+01 : f32
      %21 = vector.broadcast %cst_15 : f32 to vector<1x128xf32>
      %22 = arith.divf %20, %21 : vector<1x128xf32>
      %23 = vector.broadcast %22 : vector<1x128xf32> to vector<32x128xf32>
      %24 = arith.subf %18, %23 : vector<32x128xf32>
      %25 = arith.mulf %24, %24 : vector<32x128xf32>
      %cst_16 = arith.constant dense<0.000000e+00> : vector<128xf32>
      %26 = vector.multi_reduction <add>, %25, %cst_16 [0] : vector<32x128xf32> to vector<128xf32>
      %27 = vector.shape_cast %26 : vector<128xf32> to vector<1x128xf32>
      %cst_17 = arith.constant 3.200000e+01 : f32
      %28 = vector.broadcast %cst_17 : f32 to vector<1x128xf32>
      %29 = arith.divf %27, %28 : vector<1x128xf32>
      %cst_18 = arith.constant 9.99999974E-6 : f32
      %30 = vector.broadcast %cst_18 : f32 to vector<1x128xf32>
      %31 = arith.addf %29, %30 : vector<1x128xf32>
      %32 = math.rsqrt %31 : vector<1x128xf32>
      %c1 = arith.constant 1 : index
      %c0_19 = arith.constant 0 : index
      %33 = vector.load %arg4[%c1, %c0_19] : memref<3x128xf32, #tpu.memory_space<vmem>>, vector<1x128xf32>
      %34 = arith.mulf %33, %32 : vector<1x128xf32>
      %35 = vector.broadcast %34 : vector<1x128xf32> to vector<32x128xf32>
      %36 = arith.mulf %35, %24 : vector<32x128xf32>
      %c2 = arith.constant 2 : index
      %c0_20 = arith.constant 0 : index
      %37 = vector.load %arg4[%c2, %c0_20] : memref<3x128xf32, #tpu.memory_space<vmem>>, vector<1x128xf32>
      %38 = vector.broadcast %37 : vector<1x128xf32> to vector<32x128xf32>
      %39 = arith.addf %36, %38 : vector<32x128xf32>
      %cst_21 = arith.constant 0.000000e+00 : f32
      %40 = vector.broadcast %cst_21 : f32 to vector<32x128xf32>
      %41 = arith.maximumf %39, %40 : vector<32x128xf32>
      %42 = arith.truncf %41 : vector<32x128xf32> to vector<32x128xbf16>
      %c0_22 = arith.constant 0 : index
      %c0_23 = arith.constant 0 : index
      %43 = vector.load %arg8[%c0_22, %c0_23] : memref<32x128xbf16, #tpu.memory_space<vmem>>, vector<32x128xbf16>
      tpu.vector_store %arg8[%c0_22, %c0_23], %42 {strides = array<i32>} : memref<32x128xbf16, #tpu.memory_space<vmem>>, vector<32x128xbf16>,
    } else {
    }
    %c4_i32 = arith.constant 4 : i32
    %3 = arith.muli %arg0, %c4_i32 : i32
    %4 = arith.addi %3, %arg1 : i32
    %c0 = arith.constant 0 : index
    %c0_1 = arith.constant 0 : index
    %5 = vector.load %arg8[%c0, %c0_1] : memref<32x128xbf16, #tpu.memory_space<vmem>>, vector<32x128xbf16>
    %c0_2 = arith.constant 0 : index
    %c0_3 = arith.constant 0 : index
    %6 = vector.load %arg5[%c0_2, %c0_3] : memref<128x128xbf16, #tpu.memory_space<vmem>>, vector<128x128xbf16>
    %cst = arith.constant dense<0.000000e+00> : vector<32x128xf32>
    %7 = tpu.matmul %5, %6, %cst {dimension_numbers = #tpu.dot_dimension_numbers<[1], [0], [0], [1], [0, 0, 1, 1], [], []>} : vector<32x128xbf16>, vector<128x128xbf16>, vector<32x128xf32> -> vector<32x128xf32>
    %8 = arith.index_cast %4 : i32 to index
    %c0_4 = arith.constant 0 : index
    %9 = vector.load %arg6[%8, %c0_4] : memref<4x128xf32, #tpu.memory_space<vmem>>, vector<1x128xf32>
    %10 = vector.broadcast %9 : vector<1x128xf32> to vector<32x128xf32>
    %11 = arith.addf %7, %10 : vector<32x128xf32>
    %c0_5 = arith.constant 0 : index
    %c0_6 = arith.constant 0 : index
    %12 = vector.load %arg7[%c0_5, %c0_6] : memref<32x128xf32, #tpu.memory_space<vmem>>, vector<32x128xf32>
    tpu.vector_store %arg7[%c0_5, %c0_6], %11 {strides = array<i32>} : memref<32x128xf32, #tpu.memory_space<vmem>>, vector<32x128xf32>,
    return
  }
  func.func @transform_0(%arg0: i32, %arg1: i32) -> (i32, i32) {
    %c0_i32 = arith.constant 0 : i32
    %c0_i32_0 = arith.constant 0 : i32
    %c0_i32_1 = arith.constant 0 : i32
    return %c0_i32, %c0_i32_0 : i32, i32
  }
  func.func @transform_1(%arg0: i32, %arg1: i32) -> (i32, i32) {
    %c0_i32 = arith.constant 0 : i32
    %c0_i32_0 = arith.constant 0 : i32
    %c0_i32_1 = arith.constant 0 : i32
    return %c0_i32, %c0_i32_0 : i32, i32
  }
  func.func @transform_2(%arg0: i32, %arg1: i32) -> (i32, i32) {
    %c0_i32 = arith.constant 0 : i32
    %c0_i32_0 = arith.constant 0 : i32
    %c0_i32_1 = arith.constant 0 : i32
    return %c0_i32, %c0_i32_0 : i32, i32
  }
  func.func @transform_3(%arg0: i32, %arg1: i32) -> (i32, i32) {
    %c4_i32 = arith.constant 4 : i32
    %0 = arith.muli %arg0, %c4_i32 : i32
    %1 = arith.addi %0, %arg1 : i32
    %c0_i32 = arith.constant 0 : i32
    %c0_i32_0 = arith.constant 0 : i32
    return %c0_i32, %1 : i32, i32
  }
  func.func @transform_4(%arg0: i32, %arg1: i32) -> (i32, i32) {
    %c0_i32 = arith.constant 0 : i32
    %c0_i32_0 = arith.constant 0 : i32
    %c0_i32_1 = arith.constant 0 : i32
    return %c0_i32, %c0_i32_0 : i32, i32
  }
  func.func @transform_5(%arg0: i32, %arg1: i32) -> (i32, i32) {
    %c4_i32 = arith.constant 4 : i32
    %0 = arith.muli %arg0, %c4_i32 : i32
    %1 = arith.addi %0, %arg1 : i32
    %c0_i32 = arith.constant 0 : i32
    %c0_i32_0 = arith.constant 0 : i32
    return %c0_i32, %1 : i32, i32
  }
}

</mosaic_0001>

<llo_original>
// kernel: prediction_mlp_forward.1
$region0: #{prediction_mlp_forward.1}
  #allocation0 [shape = 'u32[]', space=smem, size = 0x4, offset = 0x4, fixed_abs, tag = 'smem constant byte address 0x4 - core index']
  #allocation1 [shape = 'u32[144,128]{1,0:T(1,128)}', space=vmem, size = 0x12000, scoped, tag = 'internal scratch']
  #allocation2 [shape = 'bf16[32,128]{1,0:T(16,128)(2,1)}', space=vmem, size = 0x2000, scoped, tag = 'scratch operand']
  %s0 = inlined_call_operand.vmem [shape: bf16[32,256], index: 0, kind: input, shape index: {}]
  %s1 = inlined_call_operand.vmem [shape: bf16[256,128], index: 1, kind: input, shape index: {}]
  %s2 = inlined_call_operand.vmem [shape: f32[3,128], index: 2, kind: input, shape index: {}]
  %s3 = inlined_call_operand.hbm [shape: bf16[128,512], index: 3, kind: input, shape index: {}]
  %s4 = inlined_call_operand.vmem [shape: f32[4,128], index: 4, kind: input, shape index: {}]
  %s5 = inlined_call_operand.hbm [shape: f32[32,512], index: 5, kind: output, shape index: {}]
  %s6 = sld [smem:[#allocation0]]
  $region61: #{prediction_mlp_forward.1} parent=0
    _
  %s8 = ssub.s32 1, %s6
  %s9 = scalar_select 0, %s8, %s6
  $region1: #{prediction_mlp_forward.1} parent=0
    #allocation3 [shape = 'u8[65536]{0}', space=vmem, size = 0x10000, scoped, tag = 'input window, operand 3']
    #allocation4 [shape = 's32[2]{0}', space=sflag, size = 0x8, scoped, tag = 'scoped memory for prediction_mlp_forward.1']
    #allocation5 [shape = 's32[2]{0}', space=sflag, size = 0x8, scoped, tag = 'scoped memory for prediction_mlp_forward.1']
    #allocation6 [shape = 'u8[32768]{0}', space=vmem, size = 0x8000, scoped, tag = 'output window, operand 0']
    %10 = vsyncpa [#allocation4], 0
    %s11 = scalar_lea.sflag [#allocation4], 1
    %12 = vsyncpa %s11, 0
    %13 = vsyncpa [#allocation5], 0
    %s14 = scalar_lea.sflag [#allocation5], 1
    %15 = vsyncpa %s14, 0
    loop: start=0, step=1, limit=6
    $region2: #{prediction_mlp_forward.1} parent=1 // loop_pre_header
      _
    $region3: #{prediction_mlp_forward.1} parent=1 // loop_header
      %s17 = sphi 0, %s21
      %p18 = scmp.ge.s32.totalorder %s17, 6
      %s24 = sphi 0, %s36
      %s25 = sphi 0, %s32
      %s26 = sphi 0, %s24
      %s27 = sphi 0, %s25
      %s28 = sphi 0, %s26
      %s29 = sphi 0, %s27
      %s37 = sphi 0, %s37
      %s39 = sphi 0, %s37
      %s40 = sphi 0, %s39
      %s54 = sphi 0, %s40
      %s58 = sphi 0, %s58
      %s60 = sphi 0, %s58
      %s61 = sphi 0, %s60
      %s75 = sphi 0, %s61
      %s79 = sphi 0, %s79
      %s81 = sphi 0, %s79
      %s82 = sphi 0, %s81
      %s96 = sphi 0, %s82
      %s106 = sphi 0, %s108
      %s109 = sphi 0, %s106
      %s110 = sphi 0, %s109
      %s126 = sphi 0, %s110
      %s130 = sphi 0, %s130
      %s132 = sphi 0, %s130
      %s133 = sphi 0, %s132
      %s147 = sphi 0, %s133
      %s157 = sphi 0, %s159
      %s160 = sphi 0, %s157
      %s161 = sphi 0, %s160
      %s177 = sphi 0, %s161
    $region4: #{prediction_mlp_forward.1} parent=1 // loop_header_branch
      %20 = sbr.rel (%p18) target = $region8
    $region5: #{prediction_mlp_forward.1} parent=1 // loop_body
      %s22 = ssub.s32 %s17, 1
      %s23 = ssub.s32 %s17, 2
      %s30 = sadd.s32 1, %s25
      %p31 = scmp.ge.s32.totalorder %s30, 4
      %s32 = scalar_select %p31, 0, %s30
      %s33 = sadd.s32 1, %s24
      %s34 = scalar_select %p31, %s33, %s24
      %p35 = scmp.ge.s32.totalorder %s34, 1
      %s36 = scalar_select %p35, 0, %s34
      %s38 = sadd.s32 %s37, 1
      %p41 = scmp.eq.s32.totalorder %s17, 3
      %p42 = scmp.ne.s32.totalorder %s37, %s39
      %p43 = scmp.eq.s32.totalorder %s17, 0
      %p44 = por %p42, %p43
      %p45 = scmp.ne.s32.totalorder %s37, %s39
      %p46 = scmp.eq.s32.totalorder %s22, 3
      %p47 = por %p45, %p46
      %p48 = scmp.ne.s32.totalorder %s39, %s40
      %p49 = scmp.eq.s32.totalorder %s22, 0
      %p50 = por %p48, %p49
      %p51 = scmp.ne.s32.totalorder %s39, %s40
      %p52 = scmp.eq.s32.totalorder %s23, 3
      %p53 = por %p51, %p52
      %p55 = scmp.ne.s32.totalorder %s40, %s54
      %p56 = scmp.eq.s32.totalorder %s23, 0
      %p57 = por %p55, %p56
      %s59 = sadd.s32 %s58, 1
      %p62 = scmp.eq.s32.totalorder %s17, 3
      %p63 = scmp.ne.s32.totalorder %s58, %s60
      %p64 = scmp.eq.s32.totalorder %s17, 0
      %p65 = por %p63, %p64
      %p66 = scmp.ne.s32.totalorder %s58, %s60
      %p67 = scmp.eq.s32.totalorder %s22, 3
      %p68 = por %p66, %p67
      %p69 = scmp.ne.s32.totalorder %s60, %s61
      %p70 = scmp.eq.s32.totalorder %s22, 0
      %p71 = por %p69, %p70
      %p72 = scmp.ne.s32.totalorder %s60, %s61
      %p73 = scmp.eq.s32.totalorder %s23, 3
      %p74 = por %p72, %p73
      %p76 = scmp.ne.s32.totalorder %s61, %s75
      %p77 = scmp.eq.s32.totalorder %s23, 0
      %p78 = por %p76, %p77
      %s80 = sadd.s32 %s79, 1
      %p83 = scmp.eq.s32.totalorder %s17, 3
      %p84 = scmp.ne.s32.totalorder %s79, %s81
      %p85 = scmp.eq.s32.totalorder %s17, 0
      %p86 = por %p84, %p85
      %p87 = scmp.ne.s32.totalorder %s79, %s81
      %p88 = scmp.eq.s32.totalorder %s22, 3
      %p89 = por %p87, %p88
      %p90 = scmp.ne.s32.totalorder %s81, %s82
      %p91 = scmp.eq.s32.totalorder %s22, 0
      %p92 = por %p90, %p91
      %p93 = scmp.ne.s32.totalorder %s81, %s82
      %p94 = scmp.eq.s32.totalorder %s23, 3
      %p95 = por %p93, %p94
      %p97 = scmp.ne.s32.totalorder %s82, %s96
      %p98 = scmp.eq.s32.totalorder %s23, 0
      %p99 = por %p97, %p98
      %s100 = smul.u32 %s24, 4
      %s101 = sadd.s32 %s100, %s25
      %s102 = smul.u32 %s36, 4
      %s103 = sadd.s32 %s102, %s32
      %s104 = ssub.s32 %s101, %s103
      %p105 = scmp.eq.s32.totalorder %s104, 0
      %s107 = sadd.s32 %s106, 1
      %s108 = scalar_select %p105, %s106, %s107
      %p111 = pneg %p105
      %p112 = scmp.eq.s32.totalorder %s17, 3
      %p113 = por %p111, %p112
      %p114 = scmp.ne.s32.totalorder %s106, %s109
      %p115 = scmp.eq.s32.totalorder %s17, 0
      %p116 = por %p114, %p115
      %p117 = scmp.ne.s32.totalorder %s106, %s109
      %p118 = scmp.eq.s32.totalorder %s22, 3
      %p119 = por %p117, %p118
      %p120 = scmp.ne.s32.totalorder %s109, %s110
      %p121 = scmp.eq.s32.totalorder %s22, 0
      %p122 = por %p120, %p121
      %p123 = scmp.ne.s32.totalorder %s109, %s110
      %p124 = scmp.eq.s32.totalorder %s23, 3
      %p125 = por %p123, %p124
      %p127 = scmp.ne.s32.totalorder %s110, %s126
      %p128 = scmp.eq.s32.totalorder %s23, 0
      %p129 = por %p127, %p128
      %s131 = sadd.s32 %s130, 1
      %p134 = scmp.eq.s32.totalorder %s17, 3
      %p135 = scmp.ne.s32.totalorder %s130, %s132
      %p136 = scmp.eq.s32.totalorder %s17, 0
      %p137 = por %p135, %p136
      %p138 = scmp.ne.s32.totalorder %s130, %s132
      %p139 = scmp.eq.s32.totalorder %s22, 3
      %p140 = por %p138, %p139
      %p141 = scmp.ne.s32.totalorder %s132, %s133
      %p142 = scmp.eq.s32.totalorder %s22, 0
      %p143 = por %p141, %p142
      %p144 = scmp.ne.s32.totalorder %s132, %s133
      %p145 = scmp.eq.s32.totalorder %s23, 3
      %p146 = por %p144, %p145
      %p148 = scmp.ne.s32.totalorder %s133, %s147
      %p149 = scmp.eq.s32.totalorder %s23, 0
      %p150 = por %p148, %p149
      %s151 = smul.u32 %s24, 4
      %s152 = sadd.s32 %s151, %s25
      %s153 = smul.u32 %s36, 4
      %s154 = sadd.s32 %s153, %s32
      %s155 = ssub.s32 %s152, %s154
      %p156 = scmp.eq.s32.totalorder %s155, 0
      %s158 = sadd.s32 %s157, 1
      %s159 = scalar_select %p156, %s157, %s158
      %p162 = pneg %p156
      %p163 = scmp.eq.s32.totalorder %s17, 3
      %p164 = por %p162, %p163
      %p165 = scmp.ne.s32.totalorder %s157, %s160
      %p166 = scmp.eq.s32.totalorder %s17, 0
      %p167 = por %p165, %p166
      %p168 = scmp.ne.s32.totalorder %s157, %s160
      %p169 = scmp.eq.s32.totalorder %s22, 3
      %p170 = por %p168, %p169
      %p171 = scmp.ne.s32.totalorder %s160, %s161
      %p172 = scmp.eq.s32.totalorder %s22, 0
      %p173 = por %p171, %p172
      %p174 = scmp.ne.s32.totalorder %s160, %s161
      %p175 = scmp.eq.s32.totalorder %s23, 3
      %p176 = por %p174, %p175
      %p178 = scmp.ne.s32.totalorder %s161, %s177
      %p179 = scmp.eq.s32.totalorder %s23, 0
      %p180 = por %p178, %p179
      %p181 = scmp.le.s32.totalorder 1, %s17
      %p182 = scmp.lt.s32.totalorder %s17, 5
      %p183 = pnand %p181, %p182
      %p184 = pneg %p183
      // Predicated region
      $region9: #{prediction_mlp_forward.1} parent=5 // pred_check
        _
      $region10: #{prediction_mlp_forward.1} parent=5 // pred_check_branch
        %186 = sbr.rel (%p183) target = $region12
      $region11: #{prediction_mlp_forward.1} parent=5 // pred_region
        %s187 = ssub.s32 %s17, 1
        // Predicated region
        $region13: #{prediction_mlp_forward.1} parent=11 // pred_check
          %p188 = pneg %p50
        $region14: #{prediction_mlp_forward.1} parent=11 // pred_check_branch
          %190 = sbr.rel (%p188) target = $region16
        $region15: #{prediction_mlp_forward.1} parent=11 // pred_region
          _
        $region16: #{prediction_mlp_forward.1} parent=11 // pred_fallthru
          _
        // Predicated region
        $region17: #{prediction_mlp_forward.1} parent=11 // pred_check
          %p191 = pneg %p71
        $region18: #{prediction_mlp_forward.1} parent=11 // pred_check_branch
          %193 = sbr.rel (%p191) target = $region20
        $region19: #{prediction_mlp_forward.1} parent=11 // pred_region
          _
        $region20: #{prediction_mlp_forward.1} parent=11 // pred_fallthru
          _
        // Predicated region
        $region21: #{prediction_mlp_forward.1} parent=11 // pred_check
          %p194 = pneg %p92
        $region22: #{prediction_mlp_forward.1} parent=11 // pred_check_branch
          %196 = sbr.rel (%p194) target = $region24
        $region23: #{prediction_mlp_forward.1} parent=11 // pred_region
          _
        $region24: #{prediction_mlp_forward.1} parent=11 // pred_fallthru
          _
        // Predicated region
        $region25: #{prediction_mlp_forward.1} parent=11 // pred_check
          %p197 = pneg %p143
        $region26: #{prediction_mlp_forward.1} parent=11 // pred_check_branch
          %199 = sbr.rel (%p197) target = $region28
        $region27: #{prediction_mlp_forward.1} parent=11 // pred_region
          _
        $region28: #{prediction_mlp_forward.1} parent=11 // pred_fallthru
          _
      $region12: #{prediction_mlp_forward.1} parent=5 // pred_fallthru
        _
      %p200 = scmp.lt.s32.totalorder %s17, 4
      // Predicated region
      $region29: #{prediction_mlp_forward.1} parent=5 // pred_check
        %p201 = pneg %p200
      $region30: #{prediction_mlp_forward.1} parent=5 // pred_check_branch
        %203 = sbr.rel (%p201) target = $region32
      $region31: #{prediction_mlp_forward.1} parent=5 // pred_region
        // Predicated region
        $region33: #{prediction_mlp_forward.1} parent=31 // pred_check
          %p204 = pneg %p116
        $region34: #{prediction_mlp_forward.1} parent=31 // pred_check_branch
          %206 = sbr.rel (%p204) target = $region36
        $region35: #{prediction_mlp_forward.1} parent=31 // pred_region
          %s207 = sand.u32 %s106, 1
          %s208 = scalar_lea.sflag [#allocation4], %s207
          %s209 = sand.u32 %s106, 1
          %s210 = smul.addr %s209, 64
          %s211 = scalar_lea.vmem [#allocation3], %s210
          %s212 = smul.u32 %s24, 4
          %s213 = sadd.s32 %s212, %s25
          %s215 = ssub.s32 1024, 1024
          %216 = vsyncadd %s208, %s215
          %s217 = smul.addr %s213, 64
          %s218 = scalar_lea.hbm %s3, %s217
          %s219 = sshll.u32 %s211, 4
          %s220 = int_to_ptr.vmem [resolvable:$true] %s219
          %225 = dma.hbm_to_vmem [thread:$0]  %s218, 1024, %s220, %s208, 256, 64, 4
        $region36: #{prediction_mlp_forward.1} parent=31 // pred_fallthru
          _
      $region32: #{prediction_mlp_forward.1} parent=5 // pred_fallthru
        _
      %p226 = scmp.le.s32.totalorder 1, %s17
      %p227 = scmp.lt.s32.totalorder %s17, 5
      %p228 = pnand %p226, %p227
      %p229 = pneg %p228
      // Predicated region
      $region37: #{prediction_mlp_forward.1} parent=5 // pred_check
        _
      $region38: #{prediction_mlp_forward.1} parent=5 // pred_check_branch
        %231 = sbr.rel (%p228) target = $region40
      $region39: #{prediction_mlp_forward.1} parent=5 // pred_region
        %s232 = ssub.s32 %s17, 1
        %s233 = sand.u32 %s109, 1
        %s234 = scalar_lea.sflag [#allocation4], %s233
        %s235 = sand.u32 %s109, 1
        %s236 = smul.addr %s235, 64
        %s237 = scalar_lea.vmem [#allocation3], %s236
        // Predicated region
        $region41: #{prediction_mlp_forward.1} parent=39 // pred_check
          %p238 = pneg %p122
        $region42: #{prediction_mlp_forward.1} parent=39 // pred_check_branch
          %240 = sbr.rel (%p238) target = $region44
        $region43: #{prediction_mlp_forward.1} parent=39 // pred_region
          %241 = dma.done %s234, 1024
        $region44: #{prediction_mlp_forward.1} parent=39 // pred_fallthru
          _
        %p242 = pneg %p50
        %p243 = pneg %p47
        %p244 = pneg %p71
        %p245 = pneg %p68
        %p246 = pneg %p92
        %p247 = pneg %p89
        %s248 = sand.u32 %s109, 1
        %s249 = scalar_lea.sflag [#allocation4], %s248
        %s250 = sand.u32 %s109, 1
        %s251 = smul.addr %s250, 64
        %s252 = scalar_lea.vmem [#allocation3], %s251
        %p253 = pneg %p122
        %p254 = pneg %p119
        %p255 = pneg %p143
        %p256 = pneg %p140
        %p257 = pneg %p173
        %p258 = pneg %p170
        %s259 = sand.u32 %s160, 1
        %s260 = scalar_lea.sflag [#allocation5], %s259
        %s261 = sand.u32 %s160, 1
        %s262 = smul.addr %s261, 32
        %s263 = scalar_lea.vmem [#allocation6], %s262
        %s264 = smul.u32 %s26, 4
        %s265 = sadd.s32 %s264, %s27
        %s266 = smul.u32 %s26, 4
        %s267 = sadd.s32 %s266, %s27
        %p269 = scmp.eq.s32.totalorder %s27, 0
        // Predicated region
        $region45: #{prediction_mlp_forward.1} parent=39 // pred_check
          %p270 = pneg %p269
        $region46: #{prediction_mlp_forward.1} parent=39 // pred_check_branch
          %272 = sbr.rel (%p270) target = $region48
        $region47: #{prediction_mlp_forward.1} parent=39 // pred_region
          %v273 = vld [vmem:[%s0] sm:$0xff]
          %v274 = vld [vmem:[%s0 + $0x8] sm:$0xff]
          %v275 = vld [vmem:[%s0 + $0x10] sm:$0xff]
          %v276 = vld [vmem:[%s0 + $0x18] sm:$0xff]
          %v277 = vld [vmem:[%s1] sm:$0xf]
          %v278 = vld [vmem:[%s1 + $0x4] sm:$0xf]
          %v279 = vld [vmem:[%s1 + $0x8] sm:$0xf]
          %v280 = vld [vmem:[%s1 + $0xc] sm:$0xf]
          %v281 = vld [vmem:[%s1 + $0x10] sm:$0xf]
          %v282 = vld [vmem:[%s1 + $0x14] sm:$0xf]
          %v283 = vld [vmem:[%s1 + $0x18] sm:$0xf]
          %v284 = vld [vmem:[%s1 + $0x1c] sm:$0xf]
          %v285 = vld [vmem:[%s1 + $0x20] sm:$0xf]
          %v286 = vld [vmem:[%s1 + $0x24] sm:$0xf]
          %v287 = vld [vmem:[%s1 + $0x28] sm:$0xf]
          %v288 = vld [vmem:[%s1 + $0x2c] sm:$0xf]
          %v289 = vld [vmem:[%s1 + $0x30] sm:$0xf]
          %v290 = vld [vmem:[%s1 + $0x34] sm:$0xf]
          %v291 = vld [vmem:[%s1 + $0x38] sm:$0xf]
          %v292 = vld [vmem:[%s1 + $0x3c] sm:$0xf]
          %v293 = vld [vmem:[%s1 + $0x40] sm:$0xf]
          %v294 = vld [vmem:[%s1 + $0x44] sm:$0xf]
          %v295 = vld [vmem:[%s1 + $0x48] sm:$0xf]
          %v296 = vld [vmem:[%s1 + $0x4c] sm:$0xf]
          %v297 = vld [vmem:[%s1 + $0x50] sm:$0xf]
          %v298 = vld [vmem:[%s1 + $0x54] sm:$0xf]
          %v299 = vld [vmem:[%s1 + $0x58] sm:$0xf]
          %v300 = vld [vmem:[%s1 + $0x5c] sm:$0xf]
          %v301 = vld [vmem:[%s1 + $0x60] sm:$0xf]
          %v302 = vld [vmem:[%s1 + $0x64] sm:$0xf]
          %v303 = vld [vmem:[%s1 + $0x68] sm:$0xf]
          %v304 = vld [vmem:[%s1 + $0x6c] sm:$0xf]
          %v305 = vld [vmem:[%s1 + $0x70] sm:$0xf]
          %v306 = vld [vmem:[%s1 + $0x74] sm:$0xf]
          %v307 = vld [vmem:[%s1 + $0x78] sm:$0xf]
          %v308 = vld [vmem:[%s1 + $0x7c] sm:$0xf]
          %v309 = vld [vmem:[%s2] sm:$0x1]
          %v310 = vlaneseq
          %v311 = vshrl.u32 %v310, 7
          %v312 = vsub.s32 0, %v311
          %v313 = vrot.slane %v309, %v312
          %v318 = vunpack.c.l.b16 %v273
          %v319 = vunpack.c.h.b16 %v273
          %v320 = vunpack.c.l.b16 %v274
          %v321 = vunpack.c.h.b16 %v274
          %v322 = vunpack.c.l.b16 %v275
          %v323 = vunpack.c.h.b16 %v275
          %v324 = vunpack.c.l.b16 %v276
          %v325 = vunpack.c.h.b16 %v276
          %v326 = vpack.c.b16 %v320, %v318
          %v327 = vpack.c.b16 %v321, %v319
          %v328 = vpack.c.b16 %v324, %v322
          %v329 = vpack.c.b16 %v325, %v323
          %v366 = vunpack.c.l.b16 %v277
          %v367 = vunpack.c.l.b16 %v278
          %v368 = vunpack.c.l.b16 %v279
          %v369 = vunpack.c.l.b16 %v280
          %v370 = vunpack.c.l.b16 %v281
          %v371 = vunpack.c.l.b16 %v282
          %v372 = vunpack.c.l.b16 %v283
          %v373 = vunpack.c.l.b16 %v284
          %v374 = vunpack.c.l.b16 %v285
          %v375 = vunpack.c.l.b16 %v286
          %v376 = vunpack.c.l.b16 %v287
          %v377 = vunpack.c.l.b16 %v288
          %v378 = vunpack.c.l.b16 %v289
          %v379 = vunpack.c.l.b16 %v290
          %v380 = vunpack.c.l.b16 %v291
          %v381 = vunpack.c.l.b16 %v292
          %v382 = vunpack.c.l.b16 %v293
          %v383 = vunpack.c.l.b16 %v294
          %v384 = vunpack.c.l.b16 %v295
          %v385 = vunpack.c.l.b16 %v296
          %v386 = vunpack.c.l.b16 %v297
          %v387 = vunpack.c.l.b16 %v298
          %v388 = vunpack.c.l.b16 %v299
          %v389 = vunpack.c.l.b16 %v300
          %v390 = vunpack.c.l.b16 %v301
          %v391 = vunpack.c.l.b16 %v302
          %v392 = vunpack.c.l.b16 %v303
          %v393 = vunpack.c.l.b16 %v304
          %v394 = vunpack.c.l.b16 %v305
          %v395 = vunpack.c.l.b16 %v306
          %v396 = vunpack.c.l.b16 %v307
          %v397 = vunpack.c.l.b16 %v308
          %v398 = vpack.c.b16 %v367, %v366
          %v399 = vpack.c.b16 %v369, %v368
          %v400 = vpack.c.b16 %v371, %v370
          %v401 = vpack.c.b16 %v373, %v372
          %v402 = vpack.c.b16 %v375, %v374
          %v403 = vpack.c.b16 %v377, %v376
          %v404 = vpack.c.b16 %v379, %v378
          %v405 = vpack.c.b16 %v381, %v380
          %v406 = vpack.c.b16 %v383, %v382
          %v407 = vpack.c.b16 %v385, %v384
          %v408 = vpack.c.b16 %v387, %v386
          %v409 = vpack.c.b16 %v389, %v388
          %v410 = vpack.c.b16 %v391, %v390
          %v411 = vpack.c.b16 %v393, %v392
          %v412 = vpack.c.b16 %v395, %v394
          %v413 = vpack.c.b16 %v397, %v396
          %430 = vmatprep.subr.bf16.mxu0 0
          %431 = vmatpush1.bf16.msra.mxu0 %v398
          %432 = vmatprep.subr.bf16.mxu0 0
          %433 = vmatpush1.bf16.msra.mxu0 %v399
          %434 = vmatprep.subr.bf16.mxu0 0
          %435 = vmatpush1.bf16.msra.mxu0 %v400
          %436 = vmatprep.subr.bf16.mxu0 0
          %437 = vmatpush1.bf16.msra.mxu0 %v401
          %438 = vmatprep.subr.bf16.mxu0 0
          %439 = vmatpush1.bf16.msra.mxu0 %v402
          %440 = vmatprep.subr.bf16.mxu0 0
          %441 = vmatpush1.bf16.msra.mxu0 %v403
          %442 = vmatprep.subr.bf16.mxu0 0
          %443 = vmatpush1.bf16.msra.mxu0 %v404
          %444 = vmatprep.subr.bf16.mxu0 0
          %445 = vmatpush1.bf16.msra.mxu0 %v405
          %446 = vmatprep.subr.bf16.mxu0 0
          %447 = vmatpush1.bf16.msra.mxu0 %v406
          %448 = vmatprep.subr.bf16.mxu0 0
          %449 = vmatpush1.bf16.msra.mxu0 %v407
          %450 = vmatprep.subr.bf16.mxu0 0
          %451 = vmatpush1.bf16.msra.mxu0 %v408
          %452 = vmatprep.subr.bf16.mxu0 0
          %453 = vmatpush1.bf16.msra.mxu0 %v409
          %454 = vmatprep.subr.bf16.mxu0 0
          %455 = vmatpush1.bf16.msra.mxu0 %v410
          %456 = vmatprep.subr.bf16.mxu0 0
          %457 = vmatpush1.bf16.msra.mxu0 %v411
          %458 = vmatprep.subr.bf16.mxu0 0
          %459 = vmatpush1.bf16.msra.mxu0 %v412
          %460 = vmatprep.subr.bf16.mxu0 0
          %461 = vmatpush1.bf16.msra.mxu0 %v413
          %462 = vmatprep.mubr.bf16.mxu0 %v327
          %463 = vmatmul.mubr.bf16.gmra.mrb[0].mxu0 %v326
          %v464 = vpop.f32.mrb[0].mxu0
          %v465 = vadd.f32 %v313, %v464
          %v466 = vpop.f32.mrb[0].mxu0
          %v467 = vpop.f32.mrb[0].mxu0
          %v468 = vadd.f32 %v313, %v467
          %v469 = vpop.f32.mrb[0].mxu0
          %470 = vmatprep.mubr.bf16.mxu0 %v329
          %471 = vmatmul.mubr.bf16.gmra.mrb[0].mxu0 %v328
          %v472 = vpop.f32.mrb[0].mxu0
          %v473 = vadd.f32 %v313, %v472
          %v474 = vpop.f32.mrb[0].mxu0
          %v475 = vpop.f32.mrb[0].mxu0
          %v476 = vadd.f32 %v313, %v475
          %v477 = vpop.f32.mrb[0].mxu0
          %478 = vdwg.mxu0
          %v479 = vadd.f32 %v465, %v468
          %v480 = vadd.f32 %v479, %v473
          %v481 = vadd.f32 %v480, %v476
          %v482 = vrot.slane %v481, 4
          %v483 = vadd.f32 %v481, %v482
          %v484 = vrot.slane %v483, 2
          %v485 = vadd.f32 %v483, %v484
          %v486 = vrot.slane %v485, 1
          %v487 = vadd.f32 %v485, %v486
          %v488 = vrcp.pop 32.0
          %v489 = vmul.f32 %v487, %v488
          %v490 = vsub.f32 %v465, %v489
          %v491 = vsub.f32 %v468, %v489
          %v492 = vsub.f32 %v473, %v489
          %v493 = vsub.f32 %v476, %v489
          %v494 = vmul.f32 %v490, %v490
          %v495 = vmul.f32 %v491, %v491
          %v496 = vmul.f32 %v492, %v492
          %v497 = vmul.f32 %v493, %v493
          %v498 = vadd.f32 %v494, %v495
          %v499 = vadd.f32 %v498, %v496
          %v500 = vadd.f32 %v499, %v497
          %v501 = vrot.slane %v500, 4
          %v502 = vadd.f32 %v500, %v501
          %v503 = vrot.slane %v502, 2
          %v504 = vadd.f32 %v502, %v503
          %v505 = vrot.slane %v504, 1
          %v506 = vadd.f32 %v504, %v505
          %v507 = vmul.f32 %v506, %v488
          %v508 = vadd.f32 %v507, 1e-05
          %v509 = vrsqrt.pop %v508
          %v510 = vld [vmem:[%s2 + $0x1] sm:$0x1]
          %v511 = vmul.f32 %v510, %v509
          %v512 = vlaneseq
          %v513 = vshrl.u32 %v512, 7
          %v514 = vsub.s32 0, %v513
          %v515 = vrot.slane %v511, %v514
          %v516 = vmul.f32 %v515, %v490
          %v517 = vmul.f32 %v515, %v491
          %v518 = vmul.f32 %v515, %v492
          %v519 = vmul.f32 %v515, %v493
          %v520 = vld [vmem:[%s2 + $0x2] sm:$0x1]
          %v521 = vlaneseq
          %v522 = vshrl.u32 %v521, 7
          %v523 = vsub.s32 0, %v522
          %v524 = vrot.slane %v520, %v523
          %v525 = vadd.f32 %v516, %v524
          %v526 = vadd.f32 %v517, %v524
          %v527 = vadd.f32 %v518, %v524
          %v528 = vadd.f32 %v519, %v524
          %v529 = vmax.f32 %v525, 0.0
          %v530 = vmax.f32 %v526, 0.0
          %v531 = vmax.f32 %v527, 0.0
          %v532 = vmax.f32 %v528, 0.0
          %v533 = vpack.c.bf16 %v530, %v529
          %v534 = vpack.c.bf16 %v532, %v531
          %535 = vst [vmem:[#allocation2] sm:$0xff] %v533
          %536 = vst [vmem:[#allocation2 + $0x8] sm:$0xff] %v534
        $region48: #{prediction_mlp_forward.1} parent=39 // pred_fallthru
          _
        %s537 = smul.u32 %s26, 4
        %s538 = sadd.s32 %s537, %s27
        %v539 = vld [vmem:[#allocation2] sm:$0xff]
        %v540 = vld [vmem:[#allocation2 + $0x8] sm:$0xff]
        %v541 = vld [vmem:[%s237] sm:$0xf]
        %v542 = vld [vmem:[%s237 + $0x4] sm:$0xf]
        %v543 = vld [vmem:[%s237 + $0x8] sm:$0xf]
        %v544 = vld [vmem:[%s237 + $0xc] sm:$0xf]
        %v545 = vld [vmem:[%s237 + $0x10] sm:$0xf]
        %v546 = vld [vmem:[%s237 + $0x14] sm:$0xf]
        %v547 = vld [vmem:[%s237 + $0x18] sm:$0xf]
        %v548 = vld [vmem:[%s237 + $0x1c] sm:$0xf]
        %v549 = vld [vmem:[%s237 + $0x20] sm:$0xf]
        %v550 = vld [vmem:[%s237 + $0x24] sm:$0xf]
        %v551 = vld [vmem:[%s237 + $0x28] sm:$0xf]
        %v552 = vld [vmem:[%s237 + $0x2c] sm:$0xf]
        %v553 = vld [vmem:[%s237 + $0x30] sm:$0xf]
        %v554 = vld [vmem:[%s237 + $0x34] sm:$0xf]
        %v555 = vld [vmem:[%s237 + $0x38] sm:$0xf]
        %v556 = vld [vmem:[%s237 + $0x3c] sm:$0xf]
        %s557 = scalar_lea.vmem %s4, %s538
        %v558 = vld [vmem:[%s557] sm:$0x1]
        %v559 = vlaneseq
        %v560 = vshrl.u32 %v559, 7
        %v561 = vsub.s32 0, %v560
        %v562 = vrot.slane %v558, %v561
        %v579 = vunpack.c.l.b16 %v541
        %v580 = vunpack.c.l.b16 %v542
        %v581 = vunpack.c.l.b16 %v543
        %v582 = vunpack.c.l.b16 %v544
        %v583 = vunpack.c.l.b16 %v545
        %v584 = vunpack.c.l.b16 %v546
        %v585 = vunpack.c.l.b16 %v547
        %v586 = vunpack.c.l.b16 %v548
        %v587 = vunpack.c.l.b16 %v549
        %v588 = vunpack.c.l.b16 %v550
        %v589 = vunpack.c.l.b16 %v551
        %v590 = vunpack.c.l.b16 %v552
        %v591 = vunpack.c.l.b16 %v553
        %v592 = vunpack.c.l.b16 %v554
        %v593 = vunpack.c.l.b16 %v555
        %v594 = vunpack.c.l.b16 %v556
        %v595 = vpack.c.b16 %v580, %v579
        %v596 = vpack.c.b16 %v582, %v581
        %v597 = vpack.c.b16 %v584, %v583
        %v598 = vpack.c.b16 %v586, %v585
        %v599 = vpack.c.b16 %v588, %v587
        %v600 = vpack.c.b16 %v590, %v589
        %v601 = vpack.c.b16 %v592, %v591
        %v602 = vpack.c.b16 %v594, %v593
        %611 = vmatprep.subr.bf16.mxu0 0
        %612 = vmatpush1.bf16.msra.mxu0 %v595
        %613 = vmatprep.subr.bf16.mxu0 0
        %614 = vmatpush1.bf16.msra.mxu0 %v596
        %615 = vmatprep.subr.bf16.mxu0 0
        %616 = vmatpush1.bf16.msra.mxu0 %v597
        %617 = vmatprep.subr.bf16.mxu0 0
        %618 = vmatpush1.bf16.msra.mxu0 %v598
        %619 = vmatprep.subr.bf16.mxu0 0
        %620 = vmatpush1.bf16.msra.mxu0 %v599
        %621 = vmatprep.subr.bf16.mxu0 0
        %622 = vmatpush1.bf16.msra.mxu0 %v600
        %623 = vmatprep.subr.bf16.mxu0 0
        %624 = vmatpush1.bf16.msra.mxu0 %v601
        %625 = vmatprep.subr.bf16.mxu0 0
        %626 = vmatpush1.bf16.msra.mxu0 %v602
        %627 = vmatprep.subr.bf16.mxu0 0
        %628 = vmatpush1.bf16.msra.mxu0 0
        %629 = vmatprep.subr.bf16.mxu0 0
        %630 = vmatpush1.bf16.msra.mxu0 0
        %631 = vmatprep.subr.bf16.mxu0 0
        %632 = vmatpush1.bf16.msra.mxu0 0
        %633 = vmatprep.subr.bf16.mxu0 0
        %634 = vmatpush1.bf16.msra.mxu0 0
        %635 = vmatprep.subr.bf16.mxu0 0
        %636 = vmatpush1.bf16.msra.mxu0 0
        %637 = vmatprep.subr.bf16.mxu0 0
        %638 = vmatpush1.bf16.msra.mxu0 0
        %639 = vmatprep.subr.bf16.mxu0 0
        %640 = vmatpush1.bf16.msra.mxu0 0
        %641 = vmatprep.subr.bf16.mxu0 0
        %642 = vmatpush1.bf16.msra.mxu0 0
        %643 = vmatprep.mubr.bf16.mxu0 0
        %644 = vmatmul.mubr.bf16.gmra.mrb[0].mxu0 %v539
        %v645 = vpop.f32.mrb[0].mxu0
        %v646 = vadd.f32 %v562, %v645
        %v647 = vpop.f32.mrb[0].mxu0
        %v648 = vpop.f32.mrb[0].mxu0
        %v649 = vadd.f32 %v562, %v648
        %v650 = vpop.f32.mrb[0].mxu0
        %651 = vmatprep.mubr.bf16.mxu0 0
        %652 = vmatmul.mubr.bf16.gmra.mrb[0].mxu0 %v540
        %v653 = vpop.f32.mrb[0].mxu0
        %v654 = vadd.f32 %v562, %v653
        %v655 = vpop.f32.mrb[0].mxu0
        %v656 = vpop.f32.mrb[0].mxu0
        %v657 = vadd.f32 %v562, %v656
        %v658 = vpop.f32.mrb[0].mxu0
        %659 = vdwg.mxu0
        %660 = vst [vmem:[%s263] sm:$0xff] %v646
        %661 = vst [vmem:[%s263 + $0x8] sm:$0xff] %v649
        %662 = vst [vmem:[%s263 + $0x10] sm:$0xff] %v654
        %663 = vst [vmem:[%s263 + $0x18] sm:$0xff] %v657
        %s664 = sand.u32 %s160, 1
        %s665 = scalar_lea.sflag [#allocation5], %s664
        %s666 = sand.u32 %s160, 1
        %s667 = smul.addr %s666, 32
        %s668 = scalar_lea.vmem [#allocation6], %s667
        // Predicated region
        $region49: #{prediction_mlp_forward.1} parent=39 // pred_check
          %p669 = pneg %p170
        $region50: #{prediction_mlp_forward.1} parent=39 // pred_check_branch
          %671 = sbr.rel (%p669) target = $region52
        $region51: #{prediction_mlp_forward.1} parent=39 // pred_region
          %s672 = smul.u32 %s26, 4
          %s673 = sadd.s32 %s672, %s27
          %s675 = ssub.s32 512, 512
          %676 = vsyncadd %s665, %s675
          %s677 = smul.addr %s673, 128
          %s678 = scalar_lea.hbm %s5, %s677
          %s679 = sshll.u32 %s668, 4
          %s680 = int_to_ptr.vmem [resolvable:$true] %s679
          %685 = dma.vmem_to_hbm [thread:$0]  %s680, 512, %s678, %s665, 128, 512, 8
        $region52: #{prediction_mlp_forward.1} parent=39 // pred_fallthru
          _
      $region40: #{prediction_mlp_forward.1} parent=5 // pred_fallthru
        _
      %p686 = scmp.le.s32.totalorder 2, %s17
      // Predicated region
      $region53: #{prediction_mlp_forward.1} parent=5 // pred_check
        %p687 = pneg %p686
      $region54: #{prediction_mlp_forward.1} parent=5 // pred_check_branch
        %689 = sbr.rel (%p687) target = $region56
      $region55: #{prediction_mlp_forward.1} parent=5 // pred_region
        %s690 = ssub.s32 %s17, 2
        // Predicated region
        $region57: #{prediction_mlp_forward.1} parent=55 // pred_check
          %p691 = pneg %p176
        $region58: #{prediction_mlp_forward.1} parent=55 // pred_check_branch
          %693 = sbr.rel (%p691) target = $region60
        $region59: #{prediction_mlp_forward.1} parent=55 // pred_region
          %s694 = sand.u32 %s161, 1
          %s695 = scalar_lea.sflag [#allocation5], %s694
          %s696 = sand.u32 %s161, 1
          %s697 = smul.addr %s696, 32
          %s698 = scalar_lea.vmem [#allocation6], %s697
          %699 = dma.done %s695, 512
        $region60: #{prediction_mlp_forward.1} parent=55 // pred_fallthru
          _
      $region56: #{prediction_mlp_forward.1} parent=5 // pred_fallthru
        _
    $region6: #{prediction_mlp_forward.1} parent=1 // loop_footer
      %s21 = sadd.s32 1, %s17
    $region7: #{prediction_mlp_forward.1} parent=1 // loop_footer_branch
      %16 = sbr.rel target = $region3
    $region8: #{prediction_mlp_forward.1} parent=1 // loop_exit
      _
    %700 = vsyncpa [#allocation4], 1
    %s701 = scalar_lea.sflag [#allocation4], 1
    %702 = vsyncpa %s701, 1
    %703 = vsyncpa [#allocation5], 1
    %s704 = scalar_lea.sflag [#allocation5], 1
    %705 = vsyncpa %s704, 1

</llo_original>
